<compile_context>
chip_gen: v7x
topology: tpu7x:2x2x1
jax: 0.10.0
libtpu: 0.0.40
codegen_flags: <defaults>
</compile_context>

<pallas_src>
import functools

import numpy as np

import jax
import jax.numpy as jnp
from jax.experimental import pallas as pl
from jax.experimental.pallas import tpu as pltpu

LANES = 128


def _pad8(n):
    return ((n + 7) // 8) * 8


# ----------------------------------------------------------------------------
# Parameter packing: all weights/biases -> one lane-dense (R, 128) f32 slab
# ----------------------------------------------------------------------------
def pack_params(params, obs_dim, act_dim, hidden_sizes):
    """Pack the EVPG tensors into one (R, 128) f32 slab (single DMA).

    Segment layout (128 lanes wide, zero padded, 8-row aligned offsets):
      w1   : obs_dim rows  cols[0:h1]=Wp1, cols[h1:h1+hv]=Wv1[:obs_dim]   (fused layer 1)
      b1   : 1 row         cols[0:h1]=bp1, cols[h1:h1+hv]=bv1
      w2   : 128 rows      rows[0:h1],  cols[0:h2]      = Wp2
      b2   : 1 row         cols[0:h2]  = bp2
      w3   : 128 rows      rows[0:h2],  cols[0:act_dim] = Wp3
      b3   : 1 row         cols[0:act_dim] = bp3
      wv1a : 1 row         cols[h1:h1+hv] = Wv1[obs_dim]  (action column of value layer 1)
      wv2  : 128 rows      rows[h1:h1+hv], col 0 = Wv2    (zero rows elsewhere mask the
                                                           garbage policy lanes of hval)
      bv2  : 1 row         col 0 = bv2
    """
    (wp1, bp1, wp2, bp2, wp3, bp3, wv1, bv1, wv2, bv2) = params
    h1, h2 = hidden_sizes
    hv = hidden_sizes[0]
    assert h1 + hv <= LANES and h2 <= LANES and act_dim <= LANES
    assert 2 + act_dim <= LANES

    segs = [("w1", obs_dim), ("b1", 1), ("w2", LANES), ("b2", 1),
            ("w3", LANES), ("b3", 1), ("wv1a", 1), ("wv2", LANES), ("bv2", 1)]
    offs, cur = {}, 0
    for name, r in segs:
        offs[name] = cur
        cur += _pad8(r)

    slab = np.zeros((cur, LANES), np.float32)
    wv1 = np.asarray(wv1, np.float32)                      # (obs_dim + 1, hv)

    slab[offs["w1"]:offs["w1"] + obs_dim, 0:h1] = np.asarray(wp1, np.float32)
    slab[offs["w1"]:offs["w1"] + obs_dim, h1:h1 + hv] = wv1[:obs_dim]
    slab[offs["b1"], 0:h1] = np.asarray(bp1, np.float32)
    slab[offs["b1"], h1:h1 + hv] = np.asarray(bv1, np.float32)
    slab[offs["w2"]:offs["w2"] + h1, 0:h2] = np.asarray(wp2, np.float32)
    slab[offs["b2"], 0:h2] = np.asarray(bp2, np.float32)
    slab[offs["w3"]:offs["w3"] + h2, 0:act_dim] = np.asarray(wp3, np.float32)
    slab[offs["b3"], 0:act_dim] = np.asarray(bp3, np.float32)
    slab[offs["wv1a"], h1:h1 + hv] = wv1[obs_dim]
    slab[offs["wv2"] + h1:offs["wv2"] + h1 + hv, 0] = np.asarray(wv2, np.float32)[:, 0]
    slab[offs["bv2"], 0] = np.asarray(bv2, np.float32)[0]
    return jnp.asarray(slab), offs


# ----------------------------------------------------------------------------
# Pallas kernel (one batch tile of environments per grid step)
# ----------------------------------------------------------------------------
def evpg_kernel(obs_ref, g_ref, w_ref, row_ref, act_ref, *, obs_dim, act_dim, offs):
    f32 = jnp.float32
    x = obs_ref[...]                                            # (B, obs_dim)
    g = g_ref[...]                                              # (B, 128) Gumbel noise

    # ---- fused first layer: [policy layer-1 | value layer-1 (obs part)] ----
    w1 = w_ref[offs["w1"]:offs["w1"] + obs_dim, :]
    b1 = w_ref[offs["b1"]:offs["b1"] + 1, :]
    pre1 = jnp.dot(x, w1, preferred_element_type=f32) + b1      # (B, 128)
    h1a = jnp.tanh(pre1)

    # ---- policy layers 2 / 3 (zero-padded weights keep rows 128-lane wide) ----
    w2 = w_ref[offs["w2"]:offs["w2"] + LANES, :]
    b2 = w_ref[offs["b2"]:offs["b2"] + 1, :]
    h2a = jnp.tanh(jnp.dot(h1a, w2, preferred_element_type=f32) + b2)
    w3 = w_ref[offs["w3"]:offs["w3"] + LANES, :]
    b3 = w_ref[offs["b3"]:offs["b3"] + 1, :]
    logits = jnp.dot(h2a, w3, preferred_element_type=f32) + b3  # lanes [0:act_dim] valid

    # ---- Categorical sample via Gumbel-max (first-index tie break == argmax) ----
    bsz = x.shape[0]
    lane = jax.lax.broadcasted_iota(jnp.int32, (bsz, LANES), 1)
    gl = jnp.where(lane < act_dim, logits + g, f32(-jnp.inf))
    mx = jnp.max(gl, axis=-1, keepdims=True)
    act = jnp.min(jnp.where(gl >= mx, lane, jnp.int32(LANES)),
                  axis=-1, keepdims=True)                       # (B, 1) int32
    act_f = act.astype(f32)

    # ---- value net on [obs, act]: reuse pre1 (obs branch), add the action column ----
    wv1a = w_ref[offs["wv1a"]:offs["wv1a"] + 1, :]
    hval = jnp.tanh(pre1 + act_f * wv1a)          # value lanes exact; policy lanes are
    wv2 = w_ref[offs["wv2"]:offs["wv2"] + LANES, :]   # garbage but killed by wv2's zero rows
    bv2 = w_ref[offs["bv2"]:offs["bv2"] + 1, :]
    qrow = jnp.dot(hval, wv2, preferred_element_type=f32) + bv2     # q at lane 0

    # ---- outputs: int32 action + lane-dense f32 row [act_f | q | logits | zeros] ----
    act_ref[...] = act
    row_ref[...] = jnp.zeros_like(row_ref)
    row_ref[:, 0:1] = act_f
    row_ref[:, 1:2] = qrow[:, 0:1]
    row_ref[:, 2:2 + act_dim] = logits[:, 0:act_dim]


# ----------------------------------------------------------------------------
# Wrapper
# ----------------------------------------------------------------------------
def make_evpg_forward(obs_dim, act_dim, offs, slab_rows, tile_b=8):
    kern = functools.partial(evpg_kernel, obs_dim=obs_dim, act_dim=act_dim, offs=offs)

    @jax.jit
    def fwd(obs, gumbel, slab):
        """obs: (B, obs_dim) f32, gumbel: (B, 128) f32 Gumbel(0,1), slab: packed weights.

        Returns per row: (act (B,) int32, Q (B,1) f32, obs_act (B, obs_dim+1) f32,
                          logits (B, act_dim) f32).
        """
        B = obs.shape[0]
        assert B % tile_b == 0
        obs2 = obs.astype(jnp.float32)
        grid = (B // tile_b,)

        flops = 2 * B * LANES * (obs_dim + 3 * LANES)
        bytes_acc = 4 * (slab_rows * LANES + B * (obs_dim + 3 * LANES + 1))

        row, act = pl.pallas_call(
            kern,
            out_shape=(jax.ShapeDtypeStruct((B, LANES), jnp.float32),
                       jax.ShapeDtypeStruct((B, 1), jnp.int32)),
            grid=grid,
            in_specs=[pl.BlockSpec((tile_b, obs_dim), lambda i: (i, 0)),
                      pl.BlockSpec((tile_b, LANES), lambda i: (i, 0)),
                      pl.BlockSpec((slab_rows, LANES), lambda i: (0, 0))],
            out_specs=(pl.BlockSpec((tile_b, LANES), lambda i: (i, 0)),
                       pl.BlockSpec((tile_b, 1), lambda i: (i, 0))),
            compiler_params=pltpu.CompilerParams(
                dimension_semantics=("parallel",)),       # v7x: shard batch tiles over 2 TCs
            cost_estimate=pl.CostEstimate(
                flops=flops, transcendentals=3 * B * LANES, bytes_accessed=bytes_acc),
        )(obs2, gumbel, slab)

        act_i = act[:, 0]                                       # (B,) int32
        q = row[:, 1:2]                                         # (B, 1) like value_net output
        obs_act = jnp.concatenate([obs2, row[:, 0:1]], axis=1)  # (B, obs_dim + 1)
        logits = row[:, 2:2 + act_dim]                          # (B, act_dim) for verification
        return act_i, q, obs_act, logits

    return fwd


# ----------------------------------------------------------------------------
# Demo + correctness check
# ----------------------------------------------------------------------------
if __name__ == "__main__":
    OBS_DIM, ACT_DIM = 16, 4
    HIDDEN_SIZES = [32, 32]
    H1, H2 = HIDDEN_SIZES
    HV = HIDDEN_SIZES[0]
    BATCH = 8          # batch of environments; per-row semantics == EVPG.forward(obs_row)

    key = jax.random.PRNGKey(0)
    k_obs, k_gum, k_par = jax.random.split(key, 3)
    ks = jax.random.split(k_par, 10)
    scale = 0.1
    f32 = jnp.float32

    wp1 = scale * jax.random.normal(ks[0], (OBS_DIM, H1), f32)
    bp1 = scale * jax.random.normal(ks[1], (H1,), f32)
    wp2 = scale * jax.random.normal(ks[2], (H1, H2), f32)
    bp2 = scale * jax.random.normal(ks[3], (H2,), f32)
    wp3 = scale * jax.random.normal(ks[4], (H2, ACT_DIM), f32)
    bp3 = scale * jax.random.normal(ks[5], (ACT_DIM,), f32)
    wv1 = scale * jax.random.normal(ks[6], (OBS_DIM + 1, HV), f32)   # Linear(obs_dim+1, HV)
    bv1 = scale * jax.random.normal(ks[7], (HV,), f32)
    wv2 = scale * jax.random.normal(ks[8], (HV, 1), f32)
    bv2 = scale * jax.random.normal(ks[9], (1,), f32)
    params = (wp1, bp1, wp2, bp2, wp3, bp3, wv1, bv1, wv2, bv2)

    obs = jax.random.normal(k_obs, (BATCH, OBS_DIM), f32)
    gumbel = jax.random.gumbel(k_gum, (BATCH, LANES), f32)   # fresh noise per forward

    slab, offs = pack_params(params, OBS_DIM, ACT_DIM, HIDDEN_SIZES)
    evpg_forward = make_evpg_forward(OBS_DIM, ACT_DIM, offs, slab.shape[0], tile_b=BATCH)

    act, q, obs_act, logits_k = evpg_forward(obs, gumbel, slab)
    jax.block_until_ready((act, q, obs_act, logits_k))

    # ---- pure-JAX reference checks ----
    hp = jnp.tanh(obs @ wp1 + bp1)
    hp = jnp.tanh(hp @ wp2 + bp2)
    logits_ref = hp @ wp3 + bp3                                # (B, ACT_DIM)
    assert jnp.allclose(logits_k, logits_ref, atol=1e-4, rtol=1e-4), (logits_k, logits_ref)

    # the sampled action must be the exact Gumbel-max of the kernel's logits + the supplied noise
    act_ref = jnp.argmax(logits_k + gumbel[:, :ACT_DIM], axis=1).astype(jnp.int32)
    assert bool(jnp.all(act == act_ref)), (act, act_ref)
    assert bool(jnp.all((act >= 0) & (act < ACT_DIM)))

    obs_act_ref = jnp.concatenate([obs, act.astype(f32)[:, None]], axis=1)
    assert jnp.allclose(obs_act, obs_act_ref, atol=1e-6)

    hv_ref = jnp.tanh(obs_act_ref @ wv1 + bv1)
    q_ref = hv_ref @ wv2 + bv2                                 # (B, 1)
    assert jnp.allclose(q, q_ref, atol=1e-4, rtol=1e-4), (q, q_ref)

    print("KERNEL_OK")
</pallas_src>

<mosaic_0001>
module attributes {stable_mosaic.version = 11 : i64} {
  func.func @evpg_kernel(%arg0: i32, %arg1: memref<8x16xf32, #tpu.memory_space<vmem>>, %arg2: memref<8x128xf32, #tpu.memory_space<vmem>>, %arg3: memref<440x128xf32, #tpu.memory_space<vmem>>, %arg4: memref<8x128xf32, #tpu.memory_space<vmem>>, %arg5: memref<8x1xi32, #tpu.memory_space<vmem>>) attributes {dimension_semantics = [#tpu.dimension_semantics<parallel>], iteration_bounds = array<i64: 1>, scalar_prefetch = 0 : i64, scratch_operands = 0 : i64, tpu.core_type = #tpu.core_type<tc>, window_params = [{transform_indices = @transform_0, window_bounds = array<i64: 8, 16>}, {transform_indices = @transform_1, window_bounds = array<i64: 8, 128>}, {pipeline_mode = #tpu.pipeline_mode<synchronous>, transform_indices = @transform_2, window_bounds = array<i64: 440, 128>}, {transform_indices = @transform_3, window_bounds = array<i64: 8, 128>}, {transform_indices = @transform_4, window_bounds = array<i64: 8, 1>}]} {
    %c0 = arith.constant 0 : index
    %c0_0 = arith.constant 0 : index
    %0 = vector.load %arg1[%c0, %c0_0] : memref<8x16xf32, #tpu.memory_space<vmem>>, vector<8x16xf32>
    %c0_1 = arith.constant 0 : index
    %c0_2 = arith.constant 0 : index
    %1 = vector.load %arg2[%c0_1, %c0_2] : memref<8x128xf32, #tpu.memory_space<vmem>>, vector<8x128xf32>
    %c0_3 = arith.constant 0 : index
    %c0_4 = arith.constant 0 : index
    %2 = vector.load %arg3[%c0_3, %c0_4] : memref<440x128xf32, #tpu.memory_space<vmem>>, vector<16x128xf32>
    %c16 = arith.constant 16 : index
    %c0_5 = arith.constant 0 : index
    %3 = vector.load %arg3[%c16, %c0_5] : memref<440x128xf32, #tpu.memory_space<vmem>>, vector<1x128xf32>
    %cst = arith.constant dense<0.000000e+00> : vector<8x128xf32>
    %4 = tpu.matmul %0, %2, %cst {dimension_numbers = #tpu.dot_dimension_numbers<[1], [0], [0], [1], [0, 0, 1, 1], [], []>} : vector<8x16xf32>, vector<16x128xf32>, vector<8x128xf32> -> vector<8x128xf32>
    %5 = vector.broadcast %3 : vector<1x128xf32> to vector<8x128xf32>
    %6 = arith.addf %4, %5 : vector<8x128xf32>
    %7 = math.tanh %6 : vector<8x128xf32>
    %c24 = arith.constant 24 : index
    %c0_6 = arith.constant 0 : index
    %8 = vector.load %arg3[%c24, %c0_6] : memref<440x128xf32, #tpu.memory_space<vmem>>, vector<128x128xf32>
    %c152 = arith.constant 152 : index
    %c0_7 = arith.constant 0 : index
    %9 = vector.load %arg3[%c152, %c0_7] : memref<440x128xf32, #tpu.memory_space<vmem>>, vector<1x128xf32>
    %cst_8 = arith.constant dense<0.000000e+00> : vector<8x128xf32>
    %10 = tpu.matmul %7, %8, %cst_8 {dimension_numbers = #tpu.dot_dimension_numbers<[1], [0], [0], [1], [0, 0, 1, 1], [], []>} : vector<8x128xf32>, vector<128x128xf32>, vector<8x128xf32> -> vector<8x128xf32>
    %11 = vector.broadcast %9 : vector<1x128xf32> to vector<8x128xf32>
    %12 = arith.addf %10, %11 : vector<8x128xf32>
    %13 = math.tanh %12 : vector<8x128xf32>
    %c160 = arith.constant 160 : index
    %c0_9 = arith.constant 0 : index
    %14 = vector.load %arg3[%c160, %c0_9] : memref<440x128xf32, #tpu.memory_space<vmem>>, vector<128x128xf32>
    %c288 = arith.constant 288 : index
    %c0_10 = arith.constant 0 : index
    %15 = vector.load %arg3[%c288, %c0_10] : memref<440x128xf32, #tpu.memory_space<vmem>>, vector<1x128xf32>
    %cst_11 = arith.constant dense<0.000000e+00> : vector<8x128xf32>
    %16 = tpu.matmul %13, %14, %cst_11 {dimension_numbers = #tpu.dot_dimension_numbers<[1], [0], [0], [1], [0, 0, 1, 1], [], []>} : vector<8x128xf32>, vector<128x128xf32>, vector<8x128xf32> -> vector<8x128xf32>
    %17 = vector.broadcast %15 : vector<1x128xf32> to vector<8x128xf32>
    %18 = arith.addf %16, %17 : vector<8x128xf32>
    %19 = tpu.iota {dimensions = array<i32: 1>} : vector<8x128xi32>
    %c4_i32 = arith.constant 4 : i32
    %20 = vector.broadcast %c4_i32 : i32 to vector<8x128xi32>
    %21 = arith.cmpi slt, %19, %20 : vector<8x128xi32>
    %22 = arith.addf %18, %1 : vector<8x128xf32>
    %cst_12 = arith.constant 0xFF800000 : f32
    %23 = vector.broadcast %cst_12 : f32 to vector<8x128xf32>
    %24 = arith.select %21, %22, %23 : vector<8x128xi1>, vector<8x128xf32>
    %cst_13 = arith.constant dense<0xFF800000> : vector<8xf32>
    %25 = vector.multi_reduction <maximumf>, %24, %cst_13 [1] : vector<8x128xf32> to vector<8xf32>
    %26 = vector.shape_cast %25 : vector<8xf32> to vector<8x1xf32>
    %27 = vector.broadcast %26 : vector<8x1xf32> to vector<8x128xf32>
    %28 = arith.cmpf oge, %24, %27 : vector<8x128xf32>
    %c128_i32 = arith.constant 128 : i32
    %29 = vector.broadcast %c128_i32 : i32 to vector<8x128xi32>
    %30 = arith.select %28, %19, %29 : vector<8x128xi1>, vector<8x128xi32>
    %cst_14 = arith.constant dense<2147483647> : vector<8xi32>
    %31 = vector.multi_reduction <minsi>, %30, %cst_14 [1] : vector<8x128xi32> to vector<8xi32>
    %32 = vector.shape_cast %31 : vector<8xi32> to vector<8x1xi32>
    %33 = arith.sitofp %32 : vector<8x1xi32> to vector<8x1xf32>
    %c296 = arith.constant 296 : index
    %c0_15 = arith.constant 0 : index
    %34 = vector.load %arg3[%c296, %c0_15] : memref<440x128xf32, #tpu.memory_space<vmem>>, vector<1x128xf32>
    %35 = vector.broadcast %33 : vector<8x1xf32> to vector<8x128xf32>
    %36 = vector.broadcast %34 : vector<1x128xf32> to vector<8x128xf32>
    %37 = arith.mulf %35, %36 : vector<8x128xf32>
    %38 = arith.addf %6, %37 : vector<8x128xf32>
    %39 = math.tanh %38 : vector<8x128xf32>
    %c304 = arith.constant 304 : index
    %c0_16 = arith.constant 0 : index
    %40 = vector.load %arg3[%c304, %c0_16] : memref<440x128xf32, #tpu.memory_space<vmem>>, vector<128x128xf32>
    %c432 = arith.constant 432 : index
    %c0_17 = arith.constant 0 : index
    %41 = vector.load %arg3[%c432, %c0_17] : memref<440x128xf32, #tpu.memory_space<vmem>>, vector<1x128xf32>
    %cst_18 = arith.constant dense<0.000000e+00> : vector<8x128xf32>
    %42 = tpu.matmul %39, %40, %cst_18 {dimension_numbers = #tpu.dot_dimension_numbers<[1], [0], [0], [1], [0, 0, 1, 1], [], []>} : vector<8x128xf32>, vector<128x128xf32>, vector<8x128xf32> -> vector<8x128xf32>
    %43 = vector.broadcast %41 : vector<1x128xf32> to vector<8x128xf32>
    %44 = arith.addf %42, %43 : vector<8x128xf32>
    %c0_19 = arith.constant 0 : index
    %c0_20 = arith.constant 0 : index
    %45 = vector.load %arg5[%c0_19, %c0_20] : memref<8x1xi32, #tpu.memory_space<vmem>>, vector<8x1xi32>
    tpu.vector_store %arg5[%c0_19, %c0_20], %32 {strides = array<i32>} : memref<8x1xi32, #tpu.memory_space<vmem>>, vector<8x1xi32>,
    %cst_21 = arith.constant 0.000000e+00 : f32
    %46 = vector.broadcast %cst_21 : f32 to vector<8x128xf32>
    %c0_22 = arith.constant 0 : index
    %c0_23 = arith.constant 0 : index
    %47 = vector.load %arg4[%c0_22, %c0_23] : memref<8x128xf32, #tpu.memory_space<vmem>>, vector<8x128xf32>
    tpu.vector_store %arg4[%c0_22, %c0_23], %46 {strides = array<i32>} : memref<8x128xf32, #tpu.memory_space<vmem>>, vector<8x128xf32>,
    %c0_24 = arith.constant 0 : index
    %c0_25 = arith.constant 0 : index
    %48 = vector.load %arg4[%c0_24, %c0_25] : memref<8x128xf32, #tpu.memory_space<vmem>>, vector<8x1xf32>
    tpu.vector_store %arg4[%c0_24, %c0_25], %33 {strides = array<i32>} : memref<8x128xf32, #tpu.memory_space<vmem>>, vector<8x1xf32>,
    %49 = vector.extract_strided_slice %44 {offsets = [0, 0], sizes = [8, 1], strides = [1, 1]} : vector<8x128xf32> to vector<8x1xf32>
    %c0_26 = arith.constant 0 : index
    %c1 = arith.constant 1 : index
    %50 = vector.load %arg4[%c0_26, %c1] : memref<8x128xf32, #tpu.memory_space<vmem>>, vector<8x1xf32>
    tpu.vector_store %arg4[%c0_26, %c1], %49 {strides = array<i32>} : memref<8x128xf32, #tpu.memory_space<vmem>>, vector<8x1xf32>,
    %51 = vector.extract_strided_slice %18 {offsets = [0, 0], sizes = [8, 4], strides = [1, 1]} : vector<8x128xf32> to vector<8x4xf32>
    %c0_27 = arith.constant 0 : index
    %c2 = arith.constant 2 : index
    %52 = vector.load %arg4[%c0_27, %c2] : memref<8x128xf32, #tpu.memory_space<vmem>>, vector<8x4xf32>
    tpu.vector_store %arg4[%c0_27, %c2], %51 {strides = array<i32>} : memref<8x128xf32, #tpu.memory_space<vmem>>, vector<8x4xf32>,
    return
  }
  func.func @transform_0(%arg0: i32) -> (i32, i32) {
    %c0_i32 = arith.constant 0 : i32
    %c0_i32_0 = arith.constant 0 : i32
    return %arg0, %c0_i32 : i32, i32
  }
  func.func @transform_1(%arg0: i32) -> (i32, i32) {
    %c0_i32 = arith.constant 0 : i32
    %c0_i32_0 = arith.constant 0 : i32
    return %arg0, %c0_i32 : i32, i32
  }
  func.func @transform_2(%arg0: i32) -> (i32, i32) {
    %c0_i32 = arith.constant 0 : i32
    %c0_i32_0 = arith.constant 0 : i32
    %c0_i32_1 = arith.constant 0 : i32
    return %c0_i32, %c0_i32_0 : i32, i32
  }
  func.func @transform_3(%arg0: i32) -> (i32, i32) {
    %c0_i32 = arith.constant 0 : i32
    %c0_i32_0 = arith.constant 0 : i32
    return %arg0, %c0_i32 : i32, i32
  }
  func.func @transform_4(%arg0: i32) -> (i32, i32) {
    %c0_i32 = arith.constant 0 : i32
    %c0_i32_0 = arith.constant 0 : i32
    return %arg0, %c0_i32 : i32, i32
  }
}

</mosaic_0001>

<llo_original>
// kernel: fwd.1
$region0: #{fwd.1}
  #allocation0 [shape = 'u32[]', space=smem, size = 0x4, offset = 0x4, fixed_abs, tag = 'smem constant byte address 0x4 - core index']
  #allocation1 [shape = 'u32[144,128]{1,0:T(1,128)}', space=vmem, size = 0x12000, scoped, tag = 'internal scratch']
  %s0 = inlined_call_operand.hbm [shape: f32[8,16], index: 0, kind: input, shape index: {}]
  %s1 = inlined_call_operand.hbm [shape: f32[8,128], index: 1, kind: input, shape index: {}]
  %s2 = inlined_call_operand.hbm [shape: f32[440,128], index: 2, kind: input, shape index: {}]
  %s3 = inlined_call_operand.vmem [shape: f32[8,128], index: 3, kind: output, shape index: {0}]
  %s4 = inlined_call_operand.vmem [shape: s32[8,1], index: 4, kind: output, shape index: {1}]
  %5 = xla_tuple %s3, %s4
  %s6 = sld [smem:[#allocation0]]
  $region42: #{fwd.1} parent=0
    _
  %s8 = ssub.s32 1, %s6
  %s9 = scalar_select 0, %s8, %s6
  $region1: #{fwd.1} parent=0
    #allocation2 [shape = 'u8[4096]{0}', space=vmem, size = 0x1000, scoped, tag = 'input window, operand 0, single buffered']
    #allocation3 [shape = 's32[1]{0}', space=sflag, size = 0x4, scoped, tag = 'scoped memory for fwd.1']
    #allocation4 [shape = 'u8[4096]{0}', space=vmem, size = 0x1000, scoped, tag = 'input window, operand 1, single buffered']
    #allocation5 [shape = 's32[1]{0}', space=sflag, size = 0x4, scoped, tag = 'scoped memory for fwd.1']
    #allocation6 [shape = 'u8[225280]{0}', space=vmem, size = 0x37000, scoped, tag = 'input window, operand 2, single buffered']
    %10 = vsyncpa [#allocation3], 0
    %11 = vsyncpa [#allocation5], 0
    // Predicated region
    $region2: #{fwd.1} parent=1 // pred_check
      _
    $region3: #{fwd.1} parent=1 // pred_check_branch
      %13 = sbr.rel (0) target = $region5
    $region4: #{fwd.1} parent=1 // pred_region
      %s15 = ssub.s32 128, 128
      %16 = vsyncadd [#allocation3], %s15
      %s18 = sshll.u32 [#allocation2], 4
      %s19 = int_to_ptr.vmem [resolvable:$true] %s18
      %21 = dma.hbm_to_vmem [thread:$0]  %s0, 128, %s19, [#allocation3]
    $region5: #{fwd.1} parent=1 // pred_fallthru
      _
    // Predicated region
    $region6: #{fwd.1} parent=1 // pred_check
      _
    $region7: #{fwd.1} parent=1 // pred_check_branch
      %23 = sbr.rel (0) target = $region9
    $region8: #{fwd.1} parent=1 // pred_region
      %s25 = ssub.s32 128, 128
      %26 = vsyncadd [#allocation5], %s25
      %s28 = sshll.u32 [#allocation4], 4
      %s29 = int_to_ptr.vmem [resolvable:$true] %s28
      %31 = dma.hbm_to_vmem [thread:$0]  %s1, 128, %s29, [#allocation5]
    $region9: #{fwd.1} parent=1 // pred_fallthru
      _
    // Predicated region
    $region10: #{fwd.1} parent=1 // pred_check
      _
    $region11: #{fwd.1} parent=1 // pred_check_branch
      %33 = sbr.rel (0) target = $region13
    $region12: #{fwd.1} parent=1 // pred_region
      %s35 = ssub.s32 7040, 7040
      %36 = vsyncadd [#allocation5], %s35
      %s37 = sshll.u32 [#allocation6], 4
      %s38 = int_to_ptr.vmem [resolvable:$true] %s37
      %43 = dma.hbm_to_vmem [thread:$0]  %s2, 7040, %s38, [#allocation5], 128, 128, 8
    $region13: #{fwd.1} parent=1 // pred_fallthru
      _
    // Predicated region
    $region14: #{fwd.1} parent=1 // pred_check
      _
    $region15: #{fwd.1} parent=1 // pred_check_branch
      %45 = sbr.rel (0) target = $region17
    $region16: #{fwd.1} parent=1 // pred_region
      %46 = dma.done [#allocation3], 128
    $region17: #{fwd.1} parent=1 // pred_fallthru
      _
    // Predicated region
    $region18: #{fwd.1} parent=1 // pred_check
      _
    $region19: #{fwd.1} parent=1 // pred_check_branch
      %48 = sbr.rel (0) target = $region21
    $region20: #{fwd.1} parent=1 // pred_region
      %49 = dma.done [#allocation5], 128
    $region21: #{fwd.1} parent=1 // pred_fallthru
      _
    // Predicated region
    $region22: #{fwd.1} parent=1 // pred_check
      _
    $region23: #{fwd.1} parent=1 // pred_check_branch
      %51 = sbr.rel (0) target = $region25
    $region24: #{fwd.1} parent=1 // pred_region
      %52 = dma.done [#allocation5], 7040
    $region25: #{fwd.1} parent=1 // pred_fallthru
      _
    %v53 = vld [vmem:[#allocation2] sm:$0xff]
    %v54 = vld [vmem:[#allocation4] sm:$0xff]
    %v55 = vld [vmem:[#allocation6] sm:$0xff]
    %v56 = vld [vmem:[#allocation6 + $0x8] sm:$0xff]
    %v57 = vld [vmem:[#allocation6 + $0x10] sm:$0x1]
    %v58 = vlaneseq
    %v59 = vshrl.u32 %v58, 7
    %v60 = vsub.s32 0, %v59
    %v61 = vrot.slane %v57, %v60
    %vm62 = vcmask 130048
    %v64 = vsel %vm62, %v53, 0
    %66 = vmatprep.subr.mxu0 0.0
    %67 = vmatpush1.msra.mxu0 %v55
    %68 = vmatprep.subr.mxu0 0.0
    %69 = vmatpush1.msra.mxu0 %v56
    %70 = vmatprep.subr.mxu0 0.0
    %71 = vmatpush1.msra.mxu0 0.0
    %72 = vmatprep.subr.mxu0 0.0
    %73 = vmatpush1.msra.mxu0 0.0
    %74 = vmatprep.subr.mxu0 0.0
    %75 = vmatpush1.msra.mxu0 0.0
    %76 = vmatprep.subr.mxu0 0.0
    %77 = vmatpush1.msra.mxu0 0.0
    %78 = vmatprep.subr.mxu0 0.0
    %79 = vmatpush1.msra.mxu0 0.0
    %80 = vmatprep.subr.mxu0 0.0
    %81 = vmatpush1.msra.mxu0 0.0
    %82 = vmatprep.subr.mxu0 0.0
    %83 = vmatpush1.msra.mxu0 0.0
    %84 = vmatprep.subr.mxu0 0.0
    %85 = vmatpush1.msra.mxu0 0.0
    %86 = vmatprep.subr.mxu0 0.0
    %87 = vmatpush1.msra.mxu0 0.0
    %88 = vmatprep.subr.mxu0 0.0
    %89 = vmatpush1.msra.mxu0 0.0
    %90 = vmatprep.subr.mxu0 0.0
    %91 = vmatpush1.msra.mxu0 0.0
    %92 = vmatprep.subr.mxu0 0.0
    %93 = vmatpush1.msra.mxu0 0.0
    %94 = vmatprep.subr.mxu0 0.0
    %95 = vmatpush1.msra.mxu0 0.0
    %96 = vmatprep.subr.mxu0 0.0
    %97 = vmatpush1.msra.mxu0 0.0
    %98 = vmatprep.subr.mxu0 0.0
    %99 = vmatpush1.msra.mxu0 0.0
    %100 = vmatprep.subr.mxu0 0.0
    %101 = vmatpush1.msra.mxu0 0.0
    %102 = vmatprep.subr.mxu0 0.0
    %103 = vmatpush1.msra.mxu0 0.0
    %104 = vmatprep.subr.mxu0 0.0
    %105 = vmatpush1.msra.mxu0 0.0
    %106 = vmatprep.subr.mxu0 0.0
    %107 = vmatpush1.msra.mxu0 0.0
    %108 = vmatprep.subr.mxu0 0.0
    %109 = vmatpush1.msra.mxu0 0.0
    %110 = vmatprep.subr.mxu0 0.0
    %111 = vmatpush1.msra.mxu0 0.0
    %112 = vmatprep.subr.mxu0 0.0
    %113 = vmatpush1.msra.mxu0 0.0
    %114 = vmatprep.subr.mxu0 0.0
    %115 = vmatpush1.msra.mxu0 0.0
    %116 = vmatprep.subr.mxu0 0.0
    %117 = vmatpush1.msra.mxu0 0.0
    %118 = vmatprep.subr.mxu0 0.0
    %119 = vmatpush1.msra.mxu0 0.0
    %120 = vmatprep.subr.mxu0 0.0
    %121 = vmatpush1.msra.mxu0 0.0
    %122 = vmatprep.subr.mxu0 0.0
    %123 = vmatpush1.msra.mxu0 0.0
    %124 = vmatprep.subr.mxu0 0.0
    %125 = vmatpush1.msra.mxu0 0.0
    %126 = vmatprep.subr.mxu0 0.0
    %127 = vmatpush1.msra.mxu0 0.0
    %128 = vmatprep.subr.mxu0 0.0
    %129 = vmatpush1.msra.mxu0 0.0
    %130 = vmatprep.mubr.f32.mxu0 0.0
    %131 = vmatmul.mubr.f32.gmra.mrb[0].mxu0 %v64
    %v132 = vpop.f32.mrb[0].mxu0
    %v133 = vadd.f32 %v61, %v132
    %v134 = vpop.f32.mrb[0].mxu0
    %135 = vdwg.mxu0
    %v136 = vtanh.pop %v133
    %v137 = vld [vmem:[#allocation6 + $0x18] sm:$0xff]
    %v138 = vld [vmem:[#allocation6 + $0x20] sm:$0xff]
    %v139 = vld [vmem:[#allocation6 + $0x28] sm:$0xff]
    %v140 = vld [vmem:[#allocation6 + $0x30] sm:$0xff]
    %v141 = vld [vmem:[#allocation6 + $0x38] sm:$0xff]
    %v142 = vld [vmem:[#allocation6 + $0x40] sm:$0xff]
    %v143 = vld [vmem:[#allocation6 + $0x48] sm:$0xff]
    %v144 = vld [vmem:[#allocation6 + $0x50] sm:$0xff]
    %v145 = vld [vmem:[#allocation6 + $0x58] sm:$0xff]
    %v146 = vld [vmem:[#allocation6 + $0x60] sm:$0xff]
    %v147 = vld [vmem:[#allocation6 + $0x68] sm:$0xff]
    %v148 = vld [vmem:[#allocation6 + $0x70] sm:$0xff]
    %v149 = vld [vmem:[#allocation6 + $0x78] sm:$0xff]
    %v150 = vld [vmem:[#allocation6 + $0x80] sm:$0xff]
    %v151 = vld [vmem:[#allocation6 + $0x88] sm:$0xff]
    %v152 = vld [vmem:[#allocation6 + $0x90] sm:$0xff]
    %v153 = vld [vmem:[#allocation6 + $0x98] sm:$0x1]
    %v154 = vlaneseq
    %v155 = vshrl.u32 %v154, 7
    %v156 = vsub.s32 0, %v155
    %v157 = vrot.slane %v153, %v156
    %158 = vmatprep.subr.mxu0 0.0
    %159 = vmatpush1.msra.mxu0 %v137
    %160 = vmatprep.subr.mxu0 0.0
    %161 = vmatpush1.msra.mxu0 %v138
    %162 = vmatprep.subr.mxu0 0.0
    %163 = vmatpush1.msra.mxu0 %v139
    %164 = vmatprep.subr.mxu0 0.0
    %165 = vmatpush1.msra.mxu0 %v140
    %166 = vmatprep.subr.mxu0 0.0
    %167 = vmatpush1.msra.mxu0 %v141
    %168 = vmatprep.subr.mxu0 0.0
    %169 = vmatpush1.msra.mxu0 %v142
    %170 = vmatprep.subr.mxu0 0.0
    %171 = vmatpush1.msra.mxu0 %v143
    %172 = vmatprep.subr.mxu0 0.0
    %173 = vmatpush1.msra.mxu0 %v144
    %174 = vmatprep.subr.mxu0 0.0
    %175 = vmatpush1.msra.mxu0 %v145
    %176 = vmatprep.subr.mxu0 0.0
    %177 = vmatpush1.msra.mxu0 %v146
    %178 = vmatprep.subr.mxu0 0.0
    %179 = vmatpush1.msra.mxu0 %v147
    %180 = vmatprep.subr.mxu0 0.0
    %181 = vmatpush1.msra.mxu0 %v148
    %182 = vmatprep.subr.mxu0 0.0
    %183 = vmatpush1.msra.mxu0 %v149
    %184 = vmatprep.subr.mxu0 0.0
    %185 = vmatpush1.msra.mxu0 %v150
    %186 = vmatprep.subr.mxu0 0.0
    %187 = vmatpush1.msra.mxu0 %v151
    %188 = vmatprep.subr.mxu0 0.0
    %189 = vmatpush1.msra.mxu0 %v152
    %190 = vmatprep.subr.mxu0 0.0
    %191 = vmatpush1.msra.mxu0 0.0
    %192 = vmatprep.subr.mxu0 0.0
    %193 = vmatpush1.msra.mxu0 0.0
    %194 = vmatprep.subr.mxu0 0.0
    %195 = vmatpush1.msra.mxu0 0.0
    %196 = vmatprep.subr.mxu0 0.0
    %197 = vmatpush1.msra.mxu0 0.0
    %198 = vmatprep.subr.mxu0 0.0
    %199 = vmatpush1.msra.mxu0 0.0
    %200 = vmatprep.subr.mxu0 0.0
    %201 = vmatpush1.msra.mxu0 0.0
    %202 = vmatprep.subr.mxu0 0.0
    %203 = vmatpush1.msra.mxu0 0.0
    %204 = vmatprep.subr.mxu0 0.0
    %205 = vmatpush1.msra.mxu0 0.0
    %206 = vmatprep.subr.mxu0 0.0
    %207 = vmatpush1.msra.mxu0 0.0
    %208 = vmatprep.subr.mxu0 0.0
    %209 = vmatpush1.msra.mxu0 0.0
    %210 = vmatprep.subr.mxu0 0.0
    %211 = vmatpush1.msra.mxu0 0.0
    %212 = vmatprep.subr.mxu0 0.0
    %213 = vmatpush1.msra.mxu0 0.0
    %214 = vmatprep.subr.mxu0 0.0
    %215 = vmatpush1.msra.mxu0 0.0
    %216 = vmatprep.subr.mxu0 0.0
    %217 = vmatpush1.msra.mxu0 0.0
    %218 = vmatprep.subr.mxu0 0.0
    %219 = vmatpush1.msra.mxu0 0.0
    %220 = vmatprep.subr.mxu0 0.0
    %221 = vmatpush1.msra.mxu0 0.0
    %222 = vmatprep.mubr.f32.mxu0 0.0
    %223 = vmatmul.mubr.f32.gmra.mrb[0].mxu0 %v136
    %v224 = vpop.f32.mrb[0].mxu0
    %v225 = vadd.f32 %v157, %v224
    %v226 = vpop.f32.mrb[0].mxu0
    %227 = vdwg.mxu0
    %v228 = vtanh.pop %v225
    %v229 = vld [vmem:[#allocation6 + $0xa0] sm:$0xff]
    %v230 = vld [vmem:[#allocation6 + $0xa8] sm:$0xff]
    %v231 = vld [vmem:[#allocation6 + $0xb0] sm:$0xff]
    %v232 = vld [vmem:[#allocation6 + $0xb8] sm:$0xff]
    %v233 = vld [vmem:[#allocation6 + $0xc0] sm:$0xff]
    %v234 = vld [vmem:[#allocation6 + $0xc8] sm:$0xff]
    %v235 = vld [vmem:[#allocation6 + $0xd0] sm:$0xff]
    %v236 = vld [vmem:[#allocation6 + $0xd8] sm:$0xff]
    %v237 = vld [vmem:[#allocation6 + $0xe0] sm:$0xff]
    %v238 = vld [vmem:[#allocation6 + $0xe8] sm:$0xff]
    %v239 = vld [vmem:[#allocation6 + $0xf0] sm:$0xff]
    %v240 = vld [vmem:[#allocation6 + $0xf8] sm:$0xff]
    %v241 = vld [vmem:[#allocation6 + $0x100] sm:$0xff]
    %v242 = vld [vmem:[#allocation6 + $0x108] sm:$0xff]
    %v243 = vld [vmem:[#allocation6 + $0x110] sm:$0xff]
    %v244 = vld [vmem:[#allocation6 + $0x118] sm:$0xff]
    %v245 = vld [vmem:[#allocation6 + $0x120] sm:$0x1]
    %v246 = vlaneseq
    %v247 = vshrl.u32 %v246, 7
    %v248 = vsub.s32 0, %v247
    %v249 = vrot.slane %v245, %v248
    %250 = vmatprep.subr.mxu0 0.0
    %251 = vmatpush1.msra.mxu0 %v229
    %252 = vmatprep.subr.mxu0 0.0
    %253 = vmatpush1.msra.mxu0 %v230
    %254 = vmatprep.subr.mxu0 0.0
    %255 = vmatpush1.msra.mxu0 %v231
    %256 = vmatprep.subr.mxu0 0.0
    %257 = vmatpush1.msra.mxu0 %v232
    %258 = vmatprep.subr.mxu0 0.0
    %259 = vmatpush1.msra.mxu0 %v233
    %260 = vmatprep.subr.mxu0 0.0
    %261 = vmatpush1.msra.mxu0 %v234
    %262 = vmatprep.subr.mxu0 0.0
    %263 = vmatpush1.msra.mxu0 %v235
    %264 = vmatprep.subr.mxu0 0.0
    %265 = vmatpush1.msra.mxu0 %v236
    %266 = vmatprep.subr.mxu0 0.0
    %267 = vmatpush1.msra.mxu0 %v237
    %268 = vmatprep.subr.mxu0 0.0
    %269 = vmatpush1.msra.mxu0 %v238
    %270 = vmatprep.subr.mxu0 0.0
    %271 = vmatpush1.msra.mxu0 %v239
    %272 = vmatprep.subr.mxu0 0.0
    %273 = vmatpush1.msra.mxu0 %v240
    %274 = vmatprep.subr.mxu0 0.0
    %275 = vmatpush1.msra.mxu0 %v241
    %276 = vmatprep.subr.mxu0 0.0
    %277 = vmatpush1.msra.mxu0 %v242
    %278 = vmatprep.subr.mxu0 0.0
    %279 = vmatpush1.msra.mxu0 %v243
    %280 = vmatprep.subr.mxu0 0.0
    %281 = vmatpush1.msra.mxu0 %v244
    %282 = vmatprep.subr.mxu0 0.0
    %283 = vmatpush1.msra.mxu0 0.0
    %284 = vmatprep.subr.mxu0 0.0
    %285 = vmatpush1.msra.mxu0 0.0
    %286 = vmatprep.subr.mxu0 0.0
    %287 = vmatpush1.msra.mxu0 0.0
    %288 = vmatprep.subr.mxu0 0.0
    %289 = vmatpush1.msra.mxu0 0.0
    %290 = vmatprep.subr.mxu0 0.0
    %291 = vmatpush1.msra.mxu0 0.0
    %292 = vmatprep.subr.mxu0 0.0
    %293 = vmatpush1.msra.mxu0 0.0
    %294 = vmatprep.subr.mxu0 0.0
    %295 = vmatpush1.msra.mxu0 0.0
    %296 = vmatprep.subr.mxu0 0.0
    %297 = vmatpush1.msra.mxu0 0.0
    %298 = vmatprep.subr.mxu0 0.0
    %299 = vmatpush1.msra.mxu0 0.0
    %300 = vmatprep.subr.mxu0 0.0
    %301 = vmatpush1.msra.mxu0 0.0
    %302 = vmatprep.subr.mxu0 0.0
    %303 = vmatpush1.msra.mxu0 0.0
    %304 = vmatprep.subr.mxu0 0.0
    %305 = vmatpush1.msra.mxu0 0.0
    %306 = vmatprep.subr.mxu0 0.0
    %307 = vmatpush1.msra.mxu0 0.0
    %308 = vmatprep.subr.mxu0 0.0
    %309 = vmatpush1.msra.mxu0 0.0
    %310 = vmatprep.subr.mxu0 0.0
    %311 = vmatpush1.msra.mxu0 0.0
    %312 = vmatprep.subr.mxu0 0.0
    %313 = vmatpush1.msra.mxu0 0.0
    %314 = vmatprep.mubr.f32.mxu0 0.0
    %315 = vmatmul.mubr.f32.gmra.mrb[0].mxu0 %v228
    %v316 = vpop.f32.mrb[0].mxu0
    %v317 = vadd.f32 %v249, %v316
    %v318 = vpop.f32.mrb[0].mxu0
    %319 = vdwg.mxu0
    %v320 = vlaneseq
    %v321 = vand.u32 %v320, 127
    %vm322 = vcmp.lt.s32.totalorder %v321, 4
    %v323 = vadd.f32 %v317, %v54
    %v324 = vsel %vm322, %v323, -inf
    %325 = vmax.xlane.f32.xlu0 %v324
    %v326 = vpop.xlane.xlu0 %325
    %vm327 = vcmp.ge.f32.partialorder %v324, %v326
    %v328 = vsel %vm327, %v321, 128
    %v329 = vand.u32 %v328, 65535
    %v330 = vshra.s32 %v328, 16
    %v331 = vcvt.s32.f32 %v329
    %v332 = vcvt.s32.f32 %v330
    %333 = vmin.xlane.f32.xlu0 %v332
    %v334 = vpop.xlane.xlu0 %333
    %vm335 = vcmp.eq.f32.partialorder %v332, %v334
    %v336 = vsel %vm335, %v331, inf
    %337 = vmin.xlane.f32.xlu0 %v336
    %v338 = vpop.xlane.xlu0 %337
    %v339 = vcvt.f32.s32 %v338
    %v340 = vcvt.f32.s32 %v334
    %v341 = vshll.u32 %v340, 16
    %v342 = vadd.s32 %v341, %v339
    %v343 = vcvt.s32.f32 %v342
    %v344 = vld [vmem:[#allocation6 + $0x128] sm:$0x1]
    %v345 = vlaneseq
    %v346 = vshrl.u32 %v345, 7
    %v347 = vsub.s32 0, %v346
    %v348 = vrot.slane %v344, %v347
    %v349 = vmul.f32 %v343, %v348
    %v350 = vadd.f32 %v133, %v349
    %v351 = vtanh.pop %v350
    %v352 = vld [vmem:[#allocation6 + $0x130] sm:$0xff]
    %v353 = vld [vmem:[#allocation6 + $0x138] sm:$0xff]
    %v354 = vld [vmem:[#allocation6 + $0x140] sm:$0xff]
    %v355 = vld [vmem:[#allocation6 + $0x148] sm:$0xff]
    %v356 = vld [vmem:[#allocation6 + $0x150] sm:$0xff]
    %v357 = vld [vmem:[#allocation6 + $0x158] sm:$0xff]
    %v358 = vld [vmem:[#allocation6 + $0x160] sm:$0xff]
    %v359 = vld [vmem:[#allocation6 + $0x168] sm:$0xff]
    %v360 = vld [vmem:[#allocation6 + $0x170] sm:$0xff]
    %v361 = vld [vmem:[#allocation6 + $0x178] sm:$0xff]
    %v362 = vld [vmem:[#allocation6 + $0x180] sm:$0xff]
    %v363 = vld [vmem:[#allocation6 + $0x188] sm:$0xff]
    %v364 = vld [vmem:[#allocation6 + $0x190] sm:$0xff]
    %v365 = vld [vmem:[#allocation6 + $0x198] sm:$0xff]
    %v366 = vld [vmem:[#allocation6 + $0x1a0] sm:$0xff]
    %v367 = vld [vmem:[#allocation6 + $0x1a8] sm:$0xff]
    %v368 = vld [vmem:[#allocation6 + $0x1b0] sm:$0x1]
    %v369 = vlaneseq
    %v370 = vshrl.u32 %v369, 7
    %v371 = vsub.s32 0, %v370
    %v372 = vrot.slane %v368, %v371
    %373 = vmatprep.subr.mxu0 0.0
    %374 = vmatpush1.msra.mxu0 %v352
    %375 = vmatprep.subr.mxu0 0.0
    %376 = vmatpush1.msra.mxu0 %v353
    %377 = vmatprep.subr.mxu0 0.0
    %378 = vmatpush1.msra.mxu0 %v354
    %379 = vmatprep.subr.mxu0 0.0
    %380 = vmatpush1.msra.mxu0 %v355
    %381 = vmatprep.subr.mxu0 0.0
    %382 = vmatpush1.msra.mxu0 %v356
    %383 = vmatprep.subr.mxu0 0.0
    %384 = vmatpush1.msra.mxu0 %v357
    %385 = vmatprep.subr.mxu0 0.0
    %386 = vmatpush1.msra.mxu0 %v358
    %387 = vmatprep.subr.mxu0 0.0
    %388 = vmatpush1.msra.mxu0 %v359
    %389 = vmatprep.subr.mxu0 0.0
    %390 = vmatpush1.msra.mxu0 %v360
    %391 = vmatprep.subr.mxu0 0.0
    %392 = vmatpush1.msra.mxu0 %v361
    %393 = vmatprep.subr.mxu0 0.0
    %394 = vmatpush1.msra.mxu0 %v362
    %395 = vmatprep.subr.mxu0 0.0
    %396 = vmatpush1.msra.mxu0 %v363
    %397 = vmatprep.subr.mxu0 0.0
    %398 = vmatpush1.msra.mxu0 %v364
    %399 = vmatprep.subr.mxu0 0.0
    %400 = vmatpush1.msra.mxu0 %v365
    %401 = vmatprep.subr.mxu0 0.0
    %402 = vmatpush1.msra.mxu0 %v366
    %403 = vmatprep.subr.mxu0 0.0
    %404 = vmatpush1.msra.mxu0 %v367
    %405 = vmatprep.subr.mxu0 0.0
    %406 = vmatpush1.msra.mxu0 0.0
    %407 = vmatprep.subr.mxu0 0.0
    %408 = vmatpush1.msra.mxu0 0.0
    %409 = vmatprep.subr.mxu0 0.0
    %410 = vmatpush1.msra.mxu0 0.0
    %411 = vmatprep.subr.mxu0 0.0
    %412 = vmatpush1.msra.mxu0 0.0
    %413 = vmatprep.subr.mxu0 0.0
    %414 = vmatpush1.msra.mxu0 0.0
    %415 = vmatprep.subr.mxu0 0.0
    %416 = vmatpush1.msra.mxu0 0.0
    %417 = vmatprep.subr.mxu0 0.0
    %418 = vmatpush1.msra.mxu0 0.0
    %419 = vmatprep.subr.mxu0 0.0
    %420 = vmatpush1.msra.mxu0 0.0
    %421 = vmatprep.subr.mxu0 0.0
    %422 = vmatpush1.msra.mxu0 0.0
    %423 = vmatprep.subr.mxu0 0.0
    %424 = vmatpush1.msra.mxu0 0.0
    %425 = vmatprep.subr.mxu0 0.0
    %426 = vmatpush1.msra.mxu0 0.0
    %427 = vmatprep.subr.mxu0 0.0
    %428 = vmatpush1.msra.mxu0 0.0
    %429 = vmatprep.subr.mxu0 0.0
    %430 = vmatpush1.msra.mxu0 0.0
    %431 = vmatprep.subr.mxu0 0.0
    %432 = vmatpush1.msra.mxu0 0.0
    %433 = vmatprep.subr.mxu0 0.0
    %434 = vmatpush1.msra.mxu0 0.0
    %435 = vmatprep.subr.mxu0 0.0
    %436 = vmatpush1.msra.mxu0 0.0
    %437 = vmatprep.mubr.f32.mxu0 0.0
    %438 = vmatmul.mubr.f32.gmra.mrb[0].mxu0 %v351
    %v439 = vpop.f32.mrb[0].mxu0
    %v440 = vadd.f32 %v372, %v439
    %v441 = vpop.f32.mrb[0].mxu0
    %442 = vdwg.mxu0
    %vm443 = vcmask 7168
    %444 = vst.msk [vmem:[%s4] sm:$0xff] %vm443, %v342
    %445 = vst [vmem:[%s3] sm:$0xff] 0.0
    %446 = vst.msk [vmem:[%s3] sm:$0xff] %vm443, %v343
    %448 = vrot.lane.b32.xlu0 %v440, 1
    %v449 = vpop.permute.xlu0 %448
    %vm451 = vcmask 15368
    %452 = vst.msk [vmem:[%s3] sm:$0xff] %vm451, %v449
    %454 = vrot.lane.b32.xlu0 %v317, 2
    %v455 = vpop.permute.xlu0 %454
    %vm457 = vcmask 48144
    %458 = vst.msk [vmem:[%s3] sm:$0xff] %vm457, %v455
    // Predicated region
    $region26: #{fwd.1} parent=1 // pred_check
      _
    $region27: #{fwd.1} parent=1 // pred_check_branch
      %460 = sbr.rel (0) target = $region29
    $region28: #{fwd.1} parent=1 // pred_region
      _
    $region29: #{fwd.1} parent=1 // pred_fallthru
      _
    // Predicated region
    $region30: #{fwd.1} parent=1 // pred_check
      _
    $region31: #{fwd.1} parent=1 // pred_check_branch
      %462 = sbr.rel (0) target = $region33
    $region32: #{fwd.1} parent=1 // pred_region
      _
    $region33: #{fwd.1} parent=1 // pred_fallthru
      _
    // Predicated region
    $region34: #{fwd.1} parent=1 // pred_check
      _
    $region35: #{fwd.1} parent=1 // pred_check_branch
      %464 = sbr.rel (0) target = $region37
    $region36: #{fwd.1} parent=1 // pred_region
      _
    $region37: #{fwd.1} parent=1 // pred_fallthru
      _
    // Predicated region
    $region38: #{fwd.1} parent=1 // pred_check
      _
    $region39: #{fwd.1} parent=1 // pred_check_branch
      %466 = sbr.rel (0) target = $region41
    $region40: #{fwd.1} parent=1 // pred_region
      _
    $region41: #{fwd.1} parent=1 // pred_fallthru
      _
    %467 = vsyncpa [#allocation3], 1
    %468 = vsyncpa [#allocation5], 1

</llo_original>
